<compile_context>
chip_gen: v7x
topology: tpu7x:2x2x1
jax: 0.10.0
libtpu: 0.0.40
codegen_flags: <defaults>
</compile_context>

<pallas_src>
import functools
import math

import jax
import jax.numpy as jnp
from jax import lax
from jax.experimental import pallas as pl
from jax.experimental.pallas import tpu as pltpu


# ---------------------------------------------------------------------------
# Guided-attention loss Pallas kernel
# ---------------------------------------------------------------------------
def _guided_attn_kernel(ilens_ref, olens_ref, att_ref, num_ref, *,
                        sigma, tb, t_out):
    """One grid step == one (batch block, T_out tile).

    att_ref : VMEM block (tb, tile_t, T_in)
    num_ref : VMEM block (1, 8, 128) per-batch-block accumulator, resident
              across the T_out-tile axis (every element holds the same sum).
    ilens_ref / olens_ref : SMEM (B_pad,) int32 scalar-prefetch refs.
    """
    bb = pl.program_id(0)      # batch block        (parallel axis)
    t_blk = pl.program_id(1)   # T_out tile index   (reduction axis, last)

    tile_t = att_ref.shape[1]
    t_in = att_ref.shape[2]

    @pl.when(t_blk == 0)
    def _():
        num_ref[...] = jnp.zeros_like(num_ref)

    # Fold -1/(2*sigma^2) into the coordinate scales:
    #   ((n/ilen - t/olen)^2) / (2*sigma^2) == (n*s/ilen - t*s/olen)^2
    scale = 1.0 / (math.sqrt(2.0) * sigma)        # Python constant

    # Small column / row iotas; full-tile work only after the broadcast-sub.
    t_ids = t_blk * tile_t + lax.broadcasted_iota(jnp.int32, (tile_t, 1), 0)
    n_ids = lax.broadcasted_iota(jnp.int32, (1, t_in), 1)
    t_f = t_ids.astype(jnp.float32)
    n_f = n_ids.astype(jnp.float32)

    def row_body(r, acc):
        b = bb * tb + r
        ilen = ilens_ref[b]
        olen = olens_ref[b]
        # min(olen, T_out) also masks ragged/OOB rows of the last T_out tile
        # and of OOB batch rows (padded lengths are 0).
        olen_eff = jnp.minimum(olen, t_out)
        inv_il = scale / jnp.maximum(ilen, 1).astype(jnp.float32)   # scalar
        inv_ol = scale / jnp.maximum(olen, 1).astype(jnp.float32)   # scalar

        t_col = t_f * inv_ol                      # (tile_t, 1)
        n_row = n_f * inv_il                      # (1, T_in)
        t_ok = t_ids < olen_eff                   # (tile_t, 1)
        n_ok = n_ids < ilen                       # (1, T_in)

        diff = n_row - t_col                      # broadcast-sub (tile_t,T_in)
        w = 1.0 - jnp.exp(-(diff * diff))         # square, exp(EUP), 1-
        valid = t_ok & n_ok                       # broadcast-and
        att = att_ref[r].astype(jnp.float32)      # (tile_t, T_in)
        # select keeps OOB / padded garbage (even NaN/Inf) out of the sum
        contrib = jnp.where(valid, w * att, 0.0)
        return acc + jnp.sum(contrib)

    tile_sum = lax.fori_loop(0, tb, row_body, jnp.float32(0.0), unroll=True)
    num_ref[...] += tile_sum


def guided_attention_loss(att_ws, ilens, olens, *, sigma=0.4, alpha=1.0,
                          max_block_bytes=8 * 1024 * 1024):
    """JAX/Pallas equivalent of GuidedAttentionLoss.forward.

    att_ws: float32 or bfloat16 (B, T_out, T_in)
    ilens, olens: int (B,)
    returns: float32 scalar
    """
    B, T_out, T_in = att_ws.shape
    ilens = ilens.astype(jnp.int32)
    olens = olens.astype(jnp.int32)

    itemsize = jnp.dtype(att_ws.dtype).itemsize
    sublane = 16 if itemsize == 2 else 8

    row_bytes = T_in * itemsize
    elem_bytes = T_out * row_bytes

    # --- choose (TB, tile_t) so a double-buffered block stays large but
    # --- within budget; no padding of att_ws is ever done.
    if elem_bytes <= max_block_bytes:
        tile_t = T_out                                      # full T_out per row
        tb = max(1, min(B, 32, max_block_bytes // max(elem_bytes, 1)))
        n_t = 1
    else:
        tb = 1
        tile_t = max(sublane, (max_block_bytes // row_bytes) // sublane * sublane)
        tile_t = min(tile_t, T_out)
        n_t = pl.cdiv(T_out, tile_t)

    num_bb = pl.cdiv(B, tb)
    b_pad = num_bb * tb

    # Denominator (count of non-padded positions) in closed form, from the
    # ORIGINAL lengths.  NOTE: all-zero lengths would give den==0 (NaN), same
    # as the torch reference.
    den = jnp.sum(jnp.minimum(olens, T_out).astype(jnp.float32) *
                  jnp.minimum(ilens, T_in).astype(jnp.float32))

    if b_pad != B:
        # Only the tiny (B,) vectors are padded; olen==0 rows contribute 0.
        ilens = jnp.pad(ilens, (0, b_pad - B))
        olens = jnp.pad(olens, (0, b_pad - B))

    kernel = functools.partial(_guided_attn_kernel, sigma=float(sigma),
                               tb=tb, t_out=T_out)

    n_elem = B * T_out * T_in
    cost = pl.CostEstimate(flops=10 * n_elem,
                           transcendentals=n_elem,
                           bytes_accessed=n_elem * itemsize)

    num = pl.pallas_call(
        kernel,
        out_shape=jax.ShapeDtypeStruct((num_bb, 8, 128), jnp.float32),
        grid_spec=pltpu.PrefetchScalarGridSpec(
            num_scalar_prefetch=2,
            grid=(num_bb, n_t),
            in_specs=[
                pl.BlockSpec((tb, tile_t, T_in), lambda b, t, il, ol: (b, t, 0)),
            ],
            out_specs=pl.BlockSpec((1, 8, 128), lambda b, t, il, ol: (b, 0, 0)),
        ),
        compiler_params=pltpu.CompilerParams(
            dimension_semantics=("parallel", "arbitrary"),
            vmem_limit_bytes=32 * 1024 * 1024,
        ),
        cost_estimate=cost,
    )(ilens, olens, att_ws)

    # masked_select(...).mean() == sum over valid positions / count of valid.
    return jnp.float32(alpha) * (jnp.sum(num[:, 0, 0]) / den)


def _reference_guided_loss(att_ws, ilens, olens, sigma=0.4, alpha=1.0):
    """Pure-JAX reference mirroring the PyTorch GuidedAttentionLoss."""
    B, T_out, T_in = att_ws.shape
    t = jnp.arange(T_out, dtype=jnp.float32)[None, :, None]
    n = jnp.arange(T_in, dtype=jnp.float32)[None, None, :]
    il = ilens.astype(jnp.float32)[:, None, None]
    ol = olens.astype(jnp.float32)[:, None, None]
    valid = (t < ol) & (n < il)
    w = 1.0 - jnp.exp(-((n / il - t / ol) ** 2) / (2.0 * sigma ** 2))
    w = jnp.where(valid, w, 0.0)
    num = jnp.sum(jnp.where(valid, w * att_ws.astype(jnp.float32), 0.0))
    den = jnp.sum(valid.astype(jnp.float32))
    return alpha * num / den


# ---------------------------------------------------------------------------
# Full Tacotron2Loss forward (flow losses are cheap masked reductions, left as
# plain JAX glue around the Pallas guided-attention kernel).
# TODO(synk): loss_z / loss_s masked reductions are left to XLA; a fused Pallas
# masked-reduction kernel only pays off at very large B * frames.
# ---------------------------------------------------------------------------
def _sequence_mask(lengths, max_len):
    """get_mask_from_lengths: True for non-padded positions."""
    return jnp.arange(max_len, dtype=jnp.int32)[None, :] < lengths[:, None]


def tacotron2_loss(model_output, targets, *, flow_sigma=1.0,
                   guided_sigma=0.4, guided_alpha=1.0):
    mel_target, gate_target, output_lengths, text_lengths = targets
    (mel_out, attention_scores, pred_output_lengths,
     log_s_sum, logdet_w_sum) = model_output

    B, n_mel, frames = mel_target.shape
    out_f = output_lengths.astype(jnp.float32)
    mel_out = mel_out.astype(jnp.float32)
    log_s_sum = log_s_sum.astype(jnp.float32)
    logdet_w_sum = logdet_w_sum.astype(jnp.float32)
    sigma2_2 = 2.0 * float(flow_sigma) ** 2

    len_pred_loss = jnp.mean(
        (jnp.log(pred_output_lengths.astype(jnp.float32)) - jnp.log(out_f)) ** 2)

    mask = _sequence_mask(output_lengths, frames)[:, None, :]      # (B, 1, T)
    n_elems = jnp.sum(out_f) * n_mel

    loss_z = jnp.sum(jnp.where(mask, mel_out, 0.0) ** 2) / sigma2_2 / n_elems
    loss_w = -jnp.sum(logdet_w_sum) / (n_mel * frames)
    log_s = log_s_sum.reshape(B, -1, frames)
    loss_s = -jnp.sum(jnp.where(mask, log_s, 0.0)) / n_elems

    att_loss = guided_attention_loss(attention_scores, text_lengths,
                                     output_lengths, sigma=guided_sigma,
                                     alpha=guided_alpha)

    loss = loss_z + loss_w + loss_s + 0.01 * len_pred_loss + att_loss
    return loss, len_pred_loss, loss_z, loss_w, loss_s, att_loss


if __name__ == "__main__":
    key = jax.random.PRNGKey(0)
    k1, k2, k3, k4, k5, k6 = jax.random.split(key, 6)

    # ------------------------------------------------------------------ #
    # Test 1: small f32 map, single-block path.
    # ------------------------------------------------------------------ #
    B, T_out, T_in = 2, 16, 8
    n_mel, frames = 8, T_out

    logits = jax.random.normal(k1, (B, T_out, T_in), dtype=jnp.float32)
    att_ws = jax.nn.softmax(logits, axis=-1)
    text_lengths = jnp.array([8, 5], dtype=jnp.int32)        # max == T_in
    output_lengths = jnp.array([16, 11], dtype=jnp.int32)    # max == T_out

    att_loss = guided_attention_loss(att_ws, text_lengths, output_lengths,
                                     sigma=0.4, alpha=1.0)
    att_loss = jax.block_until_ready(att_loss)
    ref = _reference_guided_loss(att_ws, text_lengths, output_lengths,
                                 sigma=0.4, alpha=1.0)
    assert jnp.allclose(att_loss, ref, rtol=1e-5, atol=1e-6), (att_loss, ref)

    # ------------------------------------------------------------------ #
    # Test 2: ragged T_out tiling + multi batch-block path (forced small
    # block budget so the un-padded ragged last tile is exercised).
    # ------------------------------------------------------------------ #
    B2, T_out2, T_in2 = 3, 40, 24
    logits2 = jax.random.normal(k6, (B2, T_out2, T_in2), dtype=jnp.float32)
    att_ws2 = jax.nn.softmax(logits2, axis=-1)
    il2 = jnp.array([24, 13, 1], dtype=jnp.int32)
    ol2 = jnp.array([40, 27, 5], dtype=jnp.int32)
    got2 = jax.block_until_ready(
        guided_attention_loss(att_ws2, il2, ol2, sigma=0.4, alpha=1.0,
                              max_block_bytes=1536))
    ref2 = _reference_guided_loss(att_ws2, il2, ol2, sigma=0.4, alpha=1.0)
    assert jnp.allclose(got2, ref2, rtol=1e-5, atol=1e-6), (got2, ref2)

    # ------------------------------------------------------------------ #
    # Test 3: bfloat16 input (f32 compute in-kernel).
    # ------------------------------------------------------------------ #
    att_bf16 = att_ws.astype(jnp.bfloat16)
    got3 = jax.block_until_ready(
        guided_attention_loss(att_bf16, text_lengths, output_lengths,
                              sigma=0.4, alpha=1.0))
    ref3 = _reference_guided_loss(att_bf16, text_lengths, output_lengths,
                                  sigma=0.4, alpha=1.0)
    assert jnp.allclose(got3, ref3, rtol=1e-4, atol=1e-5), (got3, ref3)

    # ------------------------------------------------------------------ #
    # Full Tacotron2Loss forward.
    # ------------------------------------------------------------------ #
    mel_target = jax.random.normal(k2, (B, n_mel, frames), dtype=jnp.float32)
    gate_target = jnp.zeros((B, frames), dtype=jnp.float32)
    mel_out = jax.random.normal(k3, (B, n_mel, frames), dtype=jnp.float32)
    log_s_sum = 0.1 * jax.random.normal(k4, (B, 4, frames), dtype=jnp.float32)
    logdet_w_sum = 0.1 * jax.random.normal(k5, (4,), dtype=jnp.float32)
    pred_output_lengths = output_lengths.astype(jnp.float32) * 1.1

    losses = tacotron2_loss(
        (mel_out, att_ws, pred_output_lengths, log_s_sum, logdet_w_sum),
        (mel_target, gate_target, output_lengths, text_lengths),
        flow_sigma=1.0, guided_sigma=0.4, guided_alpha=1.0)
    losses = jax.block_until_ready(losses)
    assert bool(jnp.isfinite(losses[0])), losses

    print("KERNEL_OK")
</pallas_src>

<mosaic_0001>
module attributes {stable_mosaic.version = 11 : i64} {
  func.func @_guided_attn_kernel(%arg0: i32, %arg1: i32, %arg2: memref<2xi32, #tpu.memory_space<smem>>, %arg3: memref<2xi32, #tpu.memory_space<smem>>, %arg4: memref<2x16x8xf32, #tpu.memory_space<vmem>>, %arg5: memref<1x8x128xf32, #tpu.memory_space<vmem>>) attributes {dimension_semantics = [#tpu.dimension_semantics<parallel>, #tpu.dimension_semantics<arbitrary>], iteration_bounds = array<i64: 1, 1>, scalar_prefetch = 2 : i64, scratch_operands = 0 : i64, tpu.core_type = #tpu.core_type<tc>, window_params = [{transform_indices = @transform_0, window_bounds = array<i64: 2, 16, 8>}, {transform_indices = @transform_1, window_bounds = array<i64: 1, 8, 128>}]} {
    %c0_i32 = arith.constant 0 : i32
    %0 = arith.cmpi eq, %arg1, %c0_i32 : i32
    %1 = arith.extui %0 : i1 to i32
    %c0_i32_0 = arith.constant 0 : i32
    %2 = arith.cmpi ne, %1, %c0_i32_0 : i32
    scf.if %2 {
      %cst_31 = arith.constant 0.000000e+00 : f32
      %102 = vector.broadcast %cst_31 : f32 to vector<1x8x128xf32>
      %c0_32 = arith.constant 0 : index
      %c0_33 = arith.constant 0 : index
      %c0_34 = arith.constant 0 : index
      %103 = vector.load %arg5[%c0_32, %c0_33, %c0_34] : memref<1x8x128xf32, #tpu.memory_space<vmem>>, vector<1x8x128xf32>
      tpu.vector_store %arg5[%c0_32, %c0_33, %c0_34], %102 {strides = array<i32>} : memref<1x8x128xf32, #tpu.memory_space<vmem>>, vector<1x8x128xf32>,
    } else {
    }
    %c16_i32 = arith.constant 16 : i32
    %3 = arith.muli %arg1, %c16_i32 : i32
    %4 = tpu.iota {dimensions = array<i32: 0>} : vector<16x1xi32>
    %5 = vector.broadcast %3 : i32 to vector<16x1xi32>
    %6 = arith.addi %5, %4 : vector<16x1xi32>
    %7 = tpu.iota {dimensions = array<i32: 1>} : vector<1x8xi32>
    %8 = arith.sitofp %6 : vector<16x1xi32> to vector<16x1xf32>
    %9 = arith.sitofp %7 : vector<1x8xi32> to vector<1x8xf32>
    %cst = arith.constant 0.000000e+00 : f32
    %c0_i32_1 = arith.constant 0 : i32
    %c2_i32 = arith.constant 2 : i32
    %10 = arith.muli %arg0, %c2_i32 : i32
    %11 = arith.addi %10, %c0_i32_1 : i32
    %12 = arith.index_cast %11 : i32 to index
    %13 = memref.load %arg2[%12] : memref<2xi32, #tpu.memory_space<smem>>
    %14 = arith.index_cast %11 : i32 to index
    %15 = memref.load %arg3[%14] : memref<2xi32, #tpu.memory_space<smem>>
    %c16_i32_2 = arith.constant 16 : i32
    %16 = arith.minsi %15, %c16_i32_2 : i32
    %c1_i32 = arith.constant 1 : i32
    %17 = arith.maxsi %13, %c1_i32 : i32
    %18 = arith.sitofp %17 : i32 to f32
    %cst_3 = arith.constant 1.76776695 : f32
    %19 = arith.divf %cst_3, %18 : f32
    %c1_i32_4 = arith.constant 1 : i32
    %20 = arith.maxsi %15, %c1_i32_4 : i32
    %21 = arith.sitofp %20 : i32 to f32
    %cst_5 = arith.constant 1.76776695 : f32
    %22 = arith.divf %cst_5, %21 : f32
    %23 = vector.broadcast %22 : f32 to vector<16x1xf32>
    %24 = arith.mulf %8, %23 : vector<16x1xf32>
    %25 = vector.broadcast %19 : f32 to vector<1x8xf32>
    %26 = arith.mulf %9, %25 : vector<1x8xf32>
    %27 = vector.broadcast %16 : i32 to vector<16x1xi32>
    %28 = arith.cmpi slt, %6, %27 : vector<16x1xi32>
    %29 = vector.broadcast %13 : i32 to vector<1x8xi32>
    %30 = arith.cmpi slt, %7, %29 : vector<1x8xi32>
    %31 = vector.broadcast %26 : vector<1x8xf32> to vector<16x8xf32>
    %32 = vector.broadcast %24 : vector<16x1xf32> to vector<16x8xf32>
    %33 = arith.subf %31, %32 : vector<16x8xf32>
    %34 = arith.mulf %33, %33 : vector<16x8xf32>
    %cst_6 = arith.constant 0.000000e+00 : f32
    %35 = vector.broadcast %cst_6 : f32 to vector<16x8xf32>
    %36 = arith.subf %35, %34 : vector<16x8xf32>
    %37 = math.exp %36 : vector<16x8xf32>
    %cst_7 = arith.constant 1.000000e+00 : f32
    %38 = vector.broadcast %cst_7 : f32 to vector<16x8xf32>
    %39 = arith.subf %38, %37 : vector<16x8xf32>
    %40 = vector.broadcast %28 : vector<16x1xi1> to vector<16x8xi1>
    %41 = vector.broadcast %30 : vector<1x8xi1> to vector<16x8xi1>
    %42 = arith.andi %40, %41 : vector<16x8xi1>
    %43 = arith.index_cast %c0_i32_1 : i32 to index
    %c0 = arith.constant 0 : index
    %c0_8 = arith.constant 0 : index
    %44 = vector.load %arg4[%43, %c0, %c0_8] : memref<2x16x8xf32, #tpu.memory_space<vmem>>, vector<1x16x8xf32>
    %45 = vector.shape_cast %44 : vector<1x16x8xf32> to vector<16x8xf32>
    %46 = arith.mulf %39, %45 : vector<16x8xf32>
    %cst_9 = arith.constant 0.000000e+00 : f32
    %47 = vector.broadcast %cst_9 : f32 to vector<16x8xf32>
    %48 = arith.select %42, %46, %47 : vector<16x8xi1>, vector<16x8xf32>
    %49 = vector.shape_cast %48 : vector<16x8xf32> to vector<1x16x8xf32>
    %cst_10 = arith.constant dense<0.000000e+00> : vector<1xf32>
    %50 = vector.multi_reduction <add>, %49, %cst_10 [1, 2] : vector<1x16x8xf32> to vector<1xf32>
    %51 = vector.shape_cast %50 : vector<1xf32> to vector<1x1x1xf32>
    %52 = vector.extract %51[0, 0, 0] : f32 from vector<1x1x1xf32>
    %53 = arith.addf %cst, %52 : f32
    %c1_i32_11 = arith.constant 1 : i32
    %c2_i32_12 = arith.constant 2 : i32
    %54 = arith.muli %arg0, %c2_i32_12 : i32
    %55 = arith.addi %54, %c1_i32_11 : i32
    %56 = arith.index_cast %55 : i32 to index
    %57 = memref.load %arg2[%56] : memref<2xi32, #tpu.memory_space<smem>>
    %58 = arith.index_cast %55 : i32 to index
    %59 = memref.load %arg3[%58] : memref<2xi32, #tpu.memory_space<smem>>
    %c16_i32_13 = arith.constant 16 : i32
    %60 = arith.minsi %59, %c16_i32_13 : i32
    %c1_i32_14 = arith.constant 1 : i32
    %61 = arith.maxsi %57, %c1_i32_14 : i32
    %62 = arith.sitofp %61 : i32 to f32
    %cst_15 = arith.constant 1.76776695 : f32
    %63 = arith.divf %cst_15, %62 : f32
    %c1_i32_16 = arith.constant 1 : i32
    %64 = arith.maxsi %59, %c1_i32_16 : i32
    %65 = arith.sitofp %64 : i32 to f32
    %cst_17 = arith.constant 1.76776695 : f32
    %66 = arith.divf %cst_17, %65 : f32
    %67 = vector.broadcast %66 : f32 to vector<16x1xf32>
    %68 = arith.mulf %8, %67 : vector<16x1xf32>
    %69 = vector.broadcast %63 : f32 to vector<1x8xf32>
    %70 = arith.mulf %9, %69 : vector<1x8xf32>
    %71 = vector.broadcast %60 : i32 to vector<16x1xi32>
    %72 = arith.cmpi slt, %6, %71 : vector<16x1xi32>
    %73 = vector.broadcast %57 : i32 to vector<1x8xi32>
    %74 = arith.cmpi slt, %7, %73 : vector<1x8xi32>
    %75 = vector.broadcast %70 : vector<1x8xf32> to vector<16x8xf32>
    %76 = vector.broadcast %68 : vector<16x1xf32> to vector<16x8xf32>
    %77 = arith.subf %75, %76 : vector<16x8xf32>
    %78 = arith.mulf %77, %77 : vector<16x8xf32>
    %cst_18 = arith.constant 0.000000e+00 : f32
    %79 = vector.broadcast %cst_18 : f32 to vector<16x8xf32>
    %80 = arith.subf %79, %78 : vector<16x8xf32>
    %81 = math.exp %80 : vector<16x8xf32>
    %cst_19 = arith.constant 1.000000e+00 : f32
    %82 = vector.broadcast %cst_19 : f32 to vector<16x8xf32>
    %83 = arith.subf %82, %81 : vector<16x8xf32>
    %84 = vector.broadcast %72 : vector<16x1xi1> to vector<16x8xi1>
    %85 = vector.broadcast %74 : vector<1x8xi1> to vector<16x8xi1>
    %86 = arith.andi %84, %85 : vector<16x8xi1>
    %87 = arith.index_cast %c1_i32_11 : i32 to index
    %c0_20 = arith.constant 0 : index
    %c0_21 = arith.constant 0 : index
    %88 = vector.load %arg4[%87, %c0_20, %c0_21] : memref<2x16x8xf32, #tpu.memory_space<vmem>>, vector<1x16x8xf32>
    %89 = vector.shape_cast %88 : vector<1x16x8xf32> to vector<16x8xf32>
    %90 = arith.mulf %83, %89 : vector<16x8xf32>
    %cst_22 = arith.constant 0.000000e+00 : f32
    %91 = vector.broadcast %cst_22 : f32 to vector<16x8xf32>
    %92 = arith.select %86, %90, %91 : vector<16x8xi1>, vector<16x8xf32>
    %93 = vector.shape_cast %92 : vector<16x8xf32> to vector<1x16x8xf32>
    %cst_23 = arith.constant dense<0.000000e+00> : vector<1xf32>
    %94 = vector.multi_reduction <add>, %93, %cst_23 [1, 2] : vector<1x16x8xf32> to vector<1xf32>
    %95 = vector.shape_cast %94 : vector<1xf32> to vector<1x1x1xf32>
    %96 = vector.extract %95[0, 0, 0] : f32 from vector<1x1x1xf32>
    %97 = arith.addf %53, %96 : f32
    %c2_i32_24 = arith.constant 2 : i32
    %c0_25 = arith.constant 0 : index
    %c0_26 = arith.constant 0 : index
    %c0_27 = arith.constant 0 : index
    %98 = vector.load %arg5[%c0_25, %c0_26, %c0_27] : memref<1x8x128xf32, #tpu.memory_space<vmem>>, vector<1x8x128xf32>
    %99 = vector.broadcast %97 : f32 to vector<1x8x128xf32>
    %100 = arith.addf %98, %99 : vector<1x8x128xf32>
    %c0_28 = arith.constant 0 : index
    %c0_29 = arith.constant 0 : index
    %c0_30 = arith.constant 0 : index
    %101 = vector.load %arg5[%c0_28, %c0_29, %c0_30] : memref<1x8x128xf32, #tpu.memory_space<vmem>>, vector<1x8x128xf32>
    tpu.vector_store %arg5[%c0_28, %c0_29, %c0_30], %100 {strides = array<i32>} : memref<1x8x128xf32, #tpu.memory_space<vmem>>, vector<1x8x128xf32>,
    return
  }
  func.func @transform_0(%arg0: i32, %arg1: i32, %arg2: memref<2xi32, #tpu.memory_space<smem>>, %arg3: memref<2xi32, #tpu.memory_space<smem>>) -> (i32, i32, i32) {
    %c0_i32 = arith.constant 0 : i32
    %c0_i32_0 = arith.constant 0 : i32
    return %arg0, %arg1, %c0_i32 : i32, i32, i32
  }
  func.func @transform_1(%arg0: i32, %arg1: i32, %arg2: memref<2xi32, #tpu.memory_space<smem>>, %arg3: memref<2xi32, #tpu.memory_space<smem>>) -> (i32, i32, i32) {
    %c0_i32 = arith.constant 0 : i32
    %c0_i32_0 = arith.constant 0 : i32
    %c0_i32_1 = arith.constant 0 : i32
    return %arg0, %c0_i32, %c0_i32_0 : i32, i32, i32
  }
}

</mosaic_0001>

<llo_original>
// kernel: tpu_custom_call.1
$region0: #{tpu_custom_call.1}
  #allocation0 [shape = 'u32[]', space=smem, size = 0x4, offset = 0x4, fixed_abs, tag = 'smem constant byte address 0x4 - core index']
  #allocation1 [shape = 'u32[144,128]{1,0:T(1,128)}', space=vmem, size = 0x12000, scoped, tag = 'internal scratch']
  #allocation2 [shape = 's32[1]{0}', space=sflag, size = 0x4, scoped, tag = 'scoped memory for tpu_custom_call.1']
  #allocation3 [shape = 'u8[512]{0}', space=smem, size = 0x200, scoped, tag = 'prefetched SMEM operand 0']
  #allocation4 [shape = 'u8[512]{0}', space=smem, size = 0x200, scoped, tag = 'prefetched SMEM operand 1']
  %s0 = inlined_call_operand.vmem [shape: s32[2], index: 0, kind: input, shape index: {}]
  %s1 = inlined_call_operand.vmem [shape: s32[2], index: 1, kind: input, shape index: {}]
  %s2 = inlined_call_operand.vmem [shape: f32[2,16,8], index: 2, kind: input, shape index: {}]
  %s3 = inlined_call_operand.hbm [shape: f32[1,8,128], index: 3, kind: output, shape index: {}]
  %s4 = sld [smem:[#allocation0]]
  $region18: #{tpu_custom_call.1} parent=0
    _
  %s6 = ssub.s32 1, %s4
  %s7 = scalar_select 0, %s6, %s4
  %s8 = sshll.u32 %s0, 4
  %s9 = int_to_ptr.vmem [resolvable:$true] %s8
  %11 = dma.vmem_to_smem %s9, 16, [#allocation3], [#allocation2]
  %s12 = sshll.u32 %s1, 4
  %s13 = int_to_ptr.vmem [resolvable:$true] %s12
  %15 = dma.vmem_to_smem %s13, 16, [#allocation4], [#allocation2]
  %16 = dma.done [#allocation2], 32
  %17 = sfence
  $region1: #{tpu_custom_call.1} parent=0
    #allocation5 [shape = 'u8[4096]{0}', space=vmem, size = 0x1000, scoped, tag = 'output window, operand 0, single buffered']
    #allocation6 [shape = 's32[1]{0}', space=sflag, size = 0x4, scoped, tag = 'scoped memory for tpu_custom_call.1']
    %18 = vsyncpa [#allocation6], 0
    // Predicated region
    $region2: #{tpu_custom_call.1} parent=1 // pred_check
      _
    $region3: #{tpu_custom_call.1} parent=1 // pred_check_branch
      %20 = sbr.rel (0) target = $region5
    $region4: #{tpu_custom_call.1} parent=1 // pred_region
      _
    $region5: #{tpu_custom_call.1} parent=1 // pred_fallthru
      _
    %p21 = scmp.eq.s32.totalorder 0, 0
    // Predicated region
    $region6: #{tpu_custom_call.1} parent=1 // pred_check
      %p22 = pneg %p21
    $region7: #{tpu_custom_call.1} parent=1 // pred_check_branch
      %24 = sbr.rel (%p22) target = $region9
    $region8: #{tpu_custom_call.1} parent=1 // pred_region
      %25 = vst [vmem:[#allocation5] sm:$0xff] 0.0
    $region9: #{tpu_custom_call.1} parent=1 // pred_fallthru
      _
    %s26 = smul.u32 0, 16
    %v27 = vlaneseq
    %v28 = vshrl.u32 %v27, 7
    %v29 = vadd.s32 %v28, 8
    %v30 = vstv %s26
    %v31 = vadd.s32 %v30, %v28
    %v32 = vadd.s32 %v30, %v29
    %v33 = vlaneseq
    %v34 = vand.u32 %v33, 127
    %v35 = vcvt.s32.f32 %v31
    %v36 = vcvt.s32.f32 %v32
    %v37 = vcvt.s32.f32 %v34
    %s38 = smul.u32 0, 2
    %s39 = sld [smem:[#allocation3 + %s38]]
    %s40 = sld [smem:[#allocation4 + %s38]]
    %p41 = scmp.lt.s32.totalorder %s40, 16
    %s42 = scalar_select %p41, %s40, 16
    %p43 = scmp.gt.s32.totalorder %s39, 1
    %s44 = scalar_select %p43, %s39, 1
    %s45 = scvt.s32.f32 %s44
    %v46 = vstv %s45
    %v47 = vrcp.pop %v46
    %s48 = vtos %v47
    %s49 = smul.f32 1.767767, %s48
    %p50 = scmp.gt.s32.totalorder %s40, 1
    %s51 = scalar_select %p50, %s40, 1
    %s52 = scvt.s32.f32 %s51
    %v53 = vstv %s52
    %v54 = vrcp.pop %v53
    %s55 = vtos %v54
    %s56 = smul.f32 1.767767, %s55
    %v57 = vstv %s56
    %v58 = vmul.f32 %v35, %v57
    %v59 = vmul.f32 %v36, %v57
    %v60 = vstv %s49
    %v61 = vmul.f32 %v37, %v60
    %v62 = vstv %s42
    %vm63 = vcmp.lt.s32.totalorder %v31, %v62
    %vm64 = vcmp.lt.s32.totalorder %v32, %v62
    %v65 = vstv %s39
    %vm66 = vcmp.lt.s32.totalorder %v34, %v65
    %v67 = vsub.f32 %v61, %v58
    %v68 = vsub.f32 %v61, %v59
    %v69 = vmul.f32 %v67, %v67
    %v70 = vmul.f32 %v68, %v68
    %v71 = vsub.f32 0.0, %v69
    %v72 = vsub.f32 0.0, %v70
    %v73 = vmul.f32 %v71, 1.442695
    %v74 = vpow.pop %v73
    %v75 = vmul.f32 %v72, 1.442695
    %v76 = vpow.pop %v75
    %v77 = vsub.f32 1.0, %v74
    %v78 = vsub.f32 1.0, %v76
    %v79 = vsel %vm63, 1, 0
    %v80 = vsel %vm64, 1, 0
    %vm81 = vcmp.eq.s32.totalorder %v79, 1
    %vm82 = vcmp.eq.s32.totalorder %v80, 1
    %v83 = vsel %vm66, 1, 0
    %vm84 = vcmp.eq.s32.totalorder %v83, 1
    %vm85 = vmand %vm81, %vm84
    %vm86 = vmand %vm82, %vm84
    %v87 = vld [vmem:[%s2] sm:$0xff]
    %v88 = vld [vmem:[%s2 + $0x8] sm:$0xff]
    %v89 = vmul.f32 %v77, %v87
    %v90 = vmul.f32 %v78, %v88
    %v91 = vsel %vm85, %v89, 0.0
    %v92 = vsel %vm86, %v90, 0.0
    %vm93 = vcmask 64512
    %v94 = vsel %vm93, %v91, 0.0
    %v95 = vsel %vm93, %v92, 0.0
    %v96 = vadd.f32 %v94, %v95
    %97 = vadd.xlane.f32.xlu0 %v96
    %v98 = vpop.xlane.xlu0 %97
    %v99 = vrot.slane %v98, 4
    %v100 = vadd.f32 %v98, %v99
    %v101 = vrot.slane %v100, 2
    %v102 = vadd.f32 %v100, %v101
    %v103 = vrot.slane %v102, 1
    %v104 = vadd.f32 %v102, %v103
    %s105 = vtos %v104
    %s106 = sadd.f32 %s105, 0.0
    %s107 = sadd.s32 %s38, 1
    %s108 = sld [smem:[#allocation3 + %s107]]
    %s109 = sld [smem:[#allocation4 + %s107]]
    %p110 = scmp.lt.s32.totalorder %s109, 16
    %s111 = scalar_select %p110, %s109, 16
    %p112 = scmp.gt.s32.totalorder %s108, 1
    %s113 = scalar_select %p112, %s108, 1
    %s114 = scvt.s32.f32 %s113
    %v115 = vstv %s114
    %v116 = vrcp.pop %v115
    %s117 = vtos %v116
    %s118 = smul.f32 1.767767, %s117
    %p119 = scmp.gt.s32.totalorder %s109, 1
    %s120 = scalar_select %p119, %s109, 1
    %s121 = scvt.s32.f32 %s120
    %v122 = vstv %s121
    %v123 = vrcp.pop %v122
    %s124 = vtos %v123
    %s125 = smul.f32 1.767767, %s124
    %v126 = vstv %s125
    %v127 = vmul.f32 %v35, %v126
    %v128 = vmul.f32 %v36, %v126
    %v129 = vstv %s118
    %v130 = vmul.f32 %v37, %v129
    %v131 = vstv %s111
    %vm132 = vcmp.lt.s32.totalorder %v31, %v131
    %vm133 = vcmp.lt.s32.totalorder %v32, %v131
    %v134 = vstv %s108
    %vm135 = vcmp.lt.s32.totalorder %v34, %v134
    %v136 = vsub.f32 %v130, %v127
    %v137 = vsub.f32 %v130, %v128
    %v138 = vmul.f32 %v136, %v136
    %v139 = vmul.f32 %v137, %v137
    %v140 = vsub.f32 0.0, %v138
    %v141 = vsub.f32 0.0, %v139
    %v142 = vmul.f32 %v140, 1.442695
    %v143 = vpow.pop %v142
    %v144 = vmul.f32 %v141, 1.442695
    %v145 = vpow.pop %v144
    %v146 = vsub.f32 1.0, %v143
    %v147 = vsub.f32 1.0, %v145
    %v148 = vsel %vm132, 1, 0
    %v149 = vsel %vm133, 1, 0
    %vm150 = vcmp.eq.s32.totalorder %v148, 1
    %vm151 = vcmp.eq.s32.totalorder %v149, 1
    %v152 = vsel %vm135, 1, 0
    %vm153 = vcmp.eq.s32.totalorder %v152, 1
    %vm154 = vmand %vm150, %vm153
    %vm155 = vmand %vm151, %vm153
    %s156 = scalar_lea.vmem %s2, 16
    %v157 = vld [vmem:[%s156] sm:$0xff]
    %v158 = vld [vmem:[%s156 + $0x8] sm:$0xff]
    %v159 = vmul.f32 %v146, %v157
    %v160 = vmul.f32 %v147, %v158
    %v161 = vsel %vm154, %v159, 0.0
    %v162 = vsel %vm155, %v160, 0.0
    %v163 = vsel %vm93, %v161, 0.0
    %v164 = vsel %vm93, %v162, 0.0
    %v165 = vadd.f32 %v163, %v164
    %166 = vadd.xlane.f32.xlu0 %v165
    %v167 = vpop.xlane.xlu0 %166
    %v168 = vrot.slane %v167, 4
    %v169 = vadd.f32 %v167, %v168
    %v170 = vrot.slane %v169, 2
    %v171 = vadd.f32 %v169, %v170
    %v172 = vrot.slane %v171, 1
    %v173 = vadd.f32 %v171, %v172
    %s174 = vtos %v173
    %s175 = sadd.f32 %s106, %s174
    %v176 = vld [vmem:[#allocation5] sm:$0xff]
    %v177 = vstv %s175
    %v178 = vadd.f32 %v176, %v177
    %179 = vst [vmem:[#allocation5] sm:$0xff] %v178
    // Predicated region
    $region10: #{tpu_custom_call.1} parent=1 // pred_check
      _
    $region11: #{tpu_custom_call.1} parent=1 // pred_check_branch
      %181 = sbr.rel (0) target = $region13
    $region12: #{tpu_custom_call.1} parent=1 // pred_region
      %s183 = ssub.s32 128, 128
      %184 = vsyncadd [#allocation6], %s183
      %s186 = sshll.u32 [#allocation5], 4
      %s187 = int_to_ptr.vmem [resolvable:$true] %s186
      %189 = dma.vmem_to_hbm [thread:$0]  %s187, 128, %s3, [#allocation6]
    $region13: #{tpu_custom_call.1} parent=1 // pred_fallthru
      _
    // Predicated region
    $region14: #{tpu_custom_call.1} parent=1 // pred_check
      _
    $region15: #{tpu_custom_call.1} parent=1 // pred_check_branch
      %191 = sbr.rel (0) target = $region17
    $region16: #{tpu_custom_call.1} parent=1 // pred_region
      %192 = dma.done [#allocation6], 128
    $region17: #{tpu_custom_call.1} parent=1 // pred_fallthru
      _
    %193 = vsyncpa [#allocation6], 1

</llo_original>
